<compile_context>
chip_gen: v6e
topology: v6e:2x2x1
jax: 0.10.0
libtpu: 0.0.40
codegen_flags: <defaults>
</compile_context>

<pallas_src>
import functools

import jax
import jax.numpy as jnp
from jax import lax
from jax.experimental import pallas as pl
from jax.experimental.pallas import tpu as pltpu

BN_EPS = 1e-5
LANE = 128        # TPU vreg lane width
_TILE = 512       # batch-tile rows (multiple of 8; 512-2048 is the sweet spot)

_BF16_VPU = None


def _has_bf16_vpu():
    """bf16 VALUs exist on TPU v6e and later; keep BN math in f32 on <= v5e."""
    global _BF16_VPU
    if _BF16_VPU is None:
        try:
            kind = jax.devices()[0].device_kind.lower()
        except Exception:
            kind = ""
        is_tpu = "tpu" in kind
        is_old = any(tag in kind for tag in ("v2", "v3", "v4", "v5"))
        _BF16_VPU = bool(is_tpu and not is_old)
    return _BF16_VPU


def _round_up(n, m):
    return ((n + m - 1) // m) * m


def _pad2(a, rows, cols, dtype):
    """Zero-pad a 2-D array up to (rows, cols) and cast to dtype."""
    out = jnp.zeros((rows, cols), dtype)
    return out.at[: a.shape[0], : a.shape[1]].set(a.astype(dtype))


def _block_bytes(*blocks):
    total = 0
    for shape, dtype in blocks:
        size = 1
        for d in shape:
            size *= int(d)
        total += size * jnp.dtype(dtype).itemsize
    return total


def _vmem_limit(block_bytes):
    # double-buffered in/out blocks + headroom, clamped under v7x's 64 MiB VMEM.
    return int(min(max(2 * block_bytes + (2 << 20), 8 << 20), 48 << 20))


# ----------------------------- per-layer kernels -----------------------------


def _linear_stats(x, w, *, tile, n_real, mask_rows):
    """z = x @ W (bf16 MXU, f32 acc) + per-feature sum / sum-of-squares of z."""
    n_pad, d_in = x.shape
    d_out = w.shape[1]
    grid = (n_pad // tile,)

    def kernel(x_ref, w_ref, z_ref, zsum_ref, zsq_ref):
        b = pl.program_id(0)
        z = jnp.dot(x_ref[...].astype(jnp.bfloat16), w_ref[...],
                    preferred_element_type=jnp.float32)
        zb = z.astype(jnp.bfloat16)          # bf16 activation for HBM + next MXU
        z_ref[...] = zb
        # Padded batch rows of x are explicit zeros and there is no bias, so
        # they contribute exactly 0 to the statistics -> no masking needed here.
        zs = zb.astype(jnp.float32)

        @pl.when(b == 0)
        def _():
            zsum_ref[...] = jnp.zeros_like(zsum_ref)
            zsq_ref[...] = jnp.zeros_like(zsq_ref)

        zsum_ref[...] += jnp.sum(zs, axis=0, keepdims=True)
        zsq_ref[...] += jnp.sum(zs * zs, axis=0, keepdims=True)

    bb = _block_bytes(((tile, d_in), x.dtype), ((d_in, d_out), jnp.bfloat16),
                      ((tile, d_out), jnp.bfloat16),
                      ((1, d_out), jnp.float32), ((1, d_out), jnp.float32))
    return pl.pallas_call(
        kernel,
        grid=grid,
        in_specs=[pl.BlockSpec((tile, d_in), lambda b: (b, 0)),
                  pl.BlockSpec((d_in, d_out), lambda b: (0, 0))],
        out_shape=(jax.ShapeDtypeStruct((n_pad, d_out), jnp.bfloat16),
                   jax.ShapeDtypeStruct((1, d_out), jnp.float32),
                   jax.ShapeDtypeStruct((1, d_out), jnp.float32)),
        out_specs=(pl.BlockSpec((tile, d_out), lambda b: (b, 0)),
                   pl.BlockSpec((1, d_out), lambda b: (0, 0)),
                   pl.BlockSpec((1, d_out), lambda b: (0, 0))),
        compiler_params=pltpu.CompilerParams(
            dimension_semantics=("arbitrary",),    # stats accumulator revisits
            vmem_limit_bytes=_vmem_limit(bb)),
    )(x, w)


def _bn_linear_stats(z_prev, s, t, w, *, tile, n_real, mask_rows, bn_dtype):
    """h = relu(z_prev*s + t); z = h @ W; accumulate sum/sumsq of z."""
    n_pad, d_in = z_prev.shape
    d_out = w.shape[1]
    grid = (n_pad // tile,)

    def kernel(zp_ref, s_ref, t_ref, w_ref, z_ref, zsum_ref, zsq_ref):
        b = pl.program_id(0)
        # Folded training-mode BN + ReLU (2 VALU ops/elem).
        h = jnp.maximum(zp_ref[...].astype(bn_dtype) * s_ref[...].astype(bn_dtype)
                        + t_ref[...].astype(bn_dtype), 0.0).astype(jnp.bfloat16)
        z = jnp.dot(h, w_ref[...], preferred_element_type=jnp.float32)
        zb = z.astype(jnp.bfloat16)
        z_ref[...] = zb
        zs = zb.astype(jnp.float32)
        if mask_rows:
            # Padded batch rows must not bias the BN statistics.
            row = b * tile + lax.broadcasted_iota(jnp.int32, (tile, 1), 0)
            zs = jnp.where(row < n_real, zs, 0.0)

        @pl.when(b == 0)
        def _():
            zsum_ref[...] = jnp.zeros_like(zsum_ref)
            zsq_ref[...] = jnp.zeros_like(zsq_ref)

        zsum_ref[...] += jnp.sum(zs, axis=0, keepdims=True)
        zsq_ref[...] += jnp.sum(zs * zs, axis=0, keepdims=True)

    bb = _block_bytes(((tile, d_in), jnp.bfloat16), ((1, d_in), jnp.float32),
                      ((1, d_in), jnp.float32), ((d_in, d_out), jnp.bfloat16),
                      ((tile, d_out), jnp.bfloat16),
                      ((1, d_out), jnp.float32), ((1, d_out), jnp.float32))
    return pl.pallas_call(
        kernel,
        grid=grid,
        in_specs=[pl.BlockSpec((tile, d_in), lambda b: (b, 0)),
                  pl.BlockSpec((1, d_in), lambda b: (0, 0)),
                  pl.BlockSpec((1, d_in), lambda b: (0, 0)),
                  pl.BlockSpec((d_in, d_out), lambda b: (0, 0))],
        out_shape=(jax.ShapeDtypeStruct((n_pad, d_out), jnp.bfloat16),
                   jax.ShapeDtypeStruct((1, d_out), jnp.float32),
                   jax.ShapeDtypeStruct((1, d_out), jnp.float32)),
        out_specs=(pl.BlockSpec((tile, d_out), lambda b: (b, 0)),
                   pl.BlockSpec((1, d_out), lambda b: (0, 0)),
                   pl.BlockSpec((1, d_out), lambda b: (0, 0))),
        compiler_params=pltpu.CompilerParams(
            dimension_semantics=("arbitrary",),
            vmem_limit_bytes=_vmem_limit(bb)),
    )(z_prev, s, t, w)


def _bn_linear_bias(z_prev, s, t, w, bias, *, tile, bn_dtype):
    """out = relu(z_prev*s + t) @ W + b  (final layer, rows independent)."""
    n_pad, d_in = z_prev.shape
    d_out = w.shape[1]
    grid = (n_pad // tile,)

    def kernel(zp_ref, s_ref, t_ref, w_ref, b_ref, o_ref):
        h = jnp.maximum(zp_ref[...].astype(bn_dtype) * s_ref[...].astype(bn_dtype)
                        + t_ref[...].astype(bn_dtype), 0.0).astype(jnp.bfloat16)
        o_ref[...] = (jnp.dot(h, w_ref[...], preferred_element_type=jnp.float32)
                      + b_ref[...]).astype(o_ref.dtype)

    bb = _block_bytes(((tile, d_in), jnp.bfloat16), ((1, d_in), jnp.float32),
                      ((1, d_in), jnp.float32), ((d_in, d_out), jnp.bfloat16),
                      ((1, d_out), jnp.float32), ((tile, d_out), jnp.float32))
    return pl.pallas_call(
        kernel,
        grid=grid,
        in_specs=[pl.BlockSpec((tile, d_in), lambda b: (b, 0)),
                  pl.BlockSpec((1, d_in), lambda b: (0, 0)),
                  pl.BlockSpec((1, d_in), lambda b: (0, 0)),
                  pl.BlockSpec((d_in, d_out), lambda b: (0, 0)),
                  pl.BlockSpec((1, d_out), lambda b: (0, 0))],
        out_shape=jax.ShapeDtypeStruct((n_pad, d_out), jnp.float32),
        out_specs=pl.BlockSpec((tile, d_out), lambda b: (b, 0)),
        compiler_params=pltpu.CompilerParams(
            dimension_semantics=("parallel",),   # no cross-tile state -> both cores
            vmem_limit_bytes=_vmem_limit(bb)),
    )(z_prev, s, t, w, bias)


# ----------------------------- wrapper ---------------------------------------


def _fold_bn(zsum, zsq, n_real, gamma_p, beta_p):
    """Fold training-mode BN into scale/shift from accumulated sum / sumsq."""
    inv_n = 1.0 / float(n_real)
    mean = zsum * inv_n
    var = jnp.maximum(zsq * inv_n - mean * mean, 0.0)   # clamp f32 cancellation
    s = gamma_p * lax.rsqrt(var + BN_EPS)
    t = beta_p - mean * s
    return s, t


def prepare_params(params):
    """One-time parameter prep (hoisted out of the forward call):
    pad feature dims to 128-lane multiples, cast weights to bf16.
    params: list of (W[in,out], b[1,out], gamma[1,out]|None, beta[1,out]|None)."""
    num = len(params)
    ws, gbs, b_last = [], [], None
    for i, (w, b, g, be) in enumerate(params):
        d_in, d_out = w.shape
        d_in_p = d_in if i == 0 else _round_up(d_in, LANE)   # x stays unpadded
        d_out_p = _round_up(d_out, LANE)
        ws.append(_pad2(w, d_in_p, d_out_p, jnp.bfloat16))
        if i < num - 1:
            # Pre-BN Linear bias dropped: exactly cancelled by BN mean subtraction.
            gbs.append((_pad2(g, 1, d_out_p, jnp.float32),
                        _pad2(be, 1, d_out_p, jnp.float32)))
        else:
            b_last = _pad2(b, 1, d_out_p, jnp.float32)
    return tuple(ws), tuple(gbs), b_last


def mlp_pallas(x, prepped, *, out_dim):
    ws, gbs, b_last = prepped
    n = x.shape[0]
    bn_dtype = jnp.bfloat16 if _has_bf16_vpu() else jnp.float32

    tile = _TILE if n >= _TILE else _round_up(n, 8)
    n_pad = _round_up(n, tile)
    mask_rows = n_pad != n
    if mask_rows:
        x_in = jnp.zeros((n_pad, x.shape[1]), x.dtype).at[:n].set(x)
    else:
        x_in = x

    # Layer 0: linear + batch statistics.
    z, zsum, zsq = _linear_stats(x_in, ws[0], tile=tile, n_real=n,
                                 mask_rows=mask_rows)
    # Hidden layers: BN+ReLU of previous z fused with next linear + stats.
    for i in range(1, len(ws) - 1):
        s, t = _fold_bn(zsum, zsq, n, *gbs[i - 1])
        z, zsum, zsq = _bn_linear_stats(z, s, t, ws[i], tile=tile, n_real=n,
                                        mask_rows=mask_rows, bn_dtype=bn_dtype)
    # Final layer: BN+ReLU + linear + bias.
    s, t = _fold_bn(zsum, zsq, n, *gbs[-1])
    out_p = _bn_linear_bias(z, s, t, ws[-1], b_last, tile=tile, bn_dtype=bn_dtype)
    # TODO(synk): for very large N, consume the padded (or bf16) output
    # downstream instead of slicing the 128-wide padded block here.
    return out_p[:n, :out_dim]


# --------------------------- references ---------------------------------------


def mlp_reference_mirror(x, params, bn_dtype):
    """Pure-JAX reference mirroring the kernels' numerics (bf16 MXU operands,
    bf16 activation storage, folded BN, bn_dtype affine)."""
    num = len(params)
    h = x.astype(jnp.bfloat16)
    for i, (w, b, g, be) in enumerate(params):
        z = jnp.dot(h, w.astype(jnp.bfloat16), preferred_element_type=jnp.float32)
        if i == num - 1:
            return z + b
        zb = z.astype(jnp.bfloat16)
        zs = zb.astype(jnp.float32)
        mean = jnp.mean(zs, axis=0, keepdims=True)
        var = jnp.maximum(jnp.mean(zs * zs, axis=0, keepdims=True) - mean * mean, 0.0)
        s = g * lax.rsqrt(var + BN_EPS)
        t = be - mean * s
        h = jnp.maximum(zb.astype(bn_dtype) * s.astype(bn_dtype)
                        + t.astype(bn_dtype), 0.0).astype(jnp.bfloat16)


def mlp_reference_f32(x, params):
    """Full-precision reference matching the PyTorch forward (training-mode BN)."""
    h = x.astype(jnp.float32)
    for (w, b, g, be) in params[:-1]:
        h = h @ w + b
        mean = jnp.mean(h, axis=0, keepdims=True)
        var = jnp.mean((h - mean) ** 2, axis=0, keepdims=True)
        h = (h - mean) / jnp.sqrt(var + BN_EPS) * g + be
        h = jnp.maximum(h, 0.0)
    w, b, _, _ = params[-1]
    return h @ w + b


def init_params(key, num_layers, input_dim, hidden_dim, output_dim):
    """Deterministic synthetic init (PyTorch-Linear-style uniform bounds)."""
    dims = [input_dim] + [hidden_dim] * (num_layers - 1) + [output_dim]
    params = []
    for i in range(num_layers):
        din, dout = dims[i], dims[i + 1]
        key, kw, kb = jax.random.split(key, 3)
        bound = 1.0 / jnp.sqrt(float(din))
        w = jax.random.uniform(kw, (din, dout), jnp.float32, -bound, bound)
        b = jax.random.uniform(kb, (1, dout), jnp.float32, -bound, bound)
        if i < num_layers - 1:
            gamma = jnp.ones((1, dout), jnp.float32)   # BN weight init = 1
            beta = jnp.zeros((1, dout), jnp.float32)   # BN bias init = 0
        else:
            gamma, beta = None, None
        params.append((w, b, gamma, beta))
    return params


if __name__ == "__main__":
    num_layers = 4
    input_dim = 16
    hidden_dim = 32
    output_dim = 8
    batch = 8

    key = jax.random.PRNGKey(0)
    key, kx = jax.random.split(key)
    x = jax.random.normal(kx, (batch, input_dim), jnp.float32)
    params = init_params(key, num_layers, input_dim, hidden_dim, output_dim)

    prepped = prepare_params(params)                      # one-time pad/cast
    forward = jax.jit(mlp_pallas, static_argnames=("out_dim",))

    out = jax.block_until_ready(forward(x, prepped, out_dim=output_dim))
    assert out.shape == (batch, output_dim)

    bn_dtype = jnp.bfloat16 if _has_bf16_vpu() else jnp.float32
    ref_mirror = mlp_reference_mirror(x, params, bn_dtype)
    assert jnp.allclose(out, ref_mirror, atol=5e-2, rtol=5e-2), \
        "Pallas output mismatch vs precision-mirrored reference"
    ref_f32 = mlp_reference_f32(x, params)
    assert jnp.allclose(out, ref_f32, atol=2e-1, rtol=2e-1), \
        "Pallas output mismatch vs f32 PyTorch-semantics reference"

    # Exercise the batch-tiled path (grid > 1, padded-row masking of BN stats).
    key, kx2 = jax.random.split(key)
    x_big = jax.random.normal(kx2, (520, input_dim), jnp.float32)
    out_big = jax.block_until_ready(forward(x_big, prepped, out_dim=output_dim))
    assert out_big.shape == (520, output_dim)
    ref_big = mlp_reference_mirror(x_big, params, bn_dtype)
    assert jnp.allclose(out_big, ref_big, atol=5e-2, rtol=5e-2), \
        "Pallas output mismatch vs mirrored reference (tiled path)"

    print("KERNEL_OK")
</pallas_src>

<mosaic_0001>
module attributes {stable_mosaic.version = 11 : i64} {
  func.func @kernel(%arg0: i32, %arg1: memref<8x128xbf16, #tpu.memory_space<vmem>>, %arg2: memref<1x128xf32, #tpu.memory_space<vmem>>, %arg3: memref<1x128xf32, #tpu.memory_space<vmem>>, %arg4: memref<128x128xbf16, #tpu.memory_space<vmem>>, %arg5: memref<8x128xbf16, #tpu.memory_space<vmem>>, %arg6: memref<1x128xf32, #tpu.memory_space<vmem>>, %arg7: memref<1x128xf32, #tpu.memory_space<vmem>>) attributes {dimension_semantics = [#tpu.dimension_semantics<arbitrary>], iteration_bounds = array<i64: 1>, scalar_prefetch = 0 : i64, scratch_operands = 0 : i64, tpu.core_type = #tpu.core_type<tc>, window_params = [{transform_indices = @transform_0, window_bounds = array<i64: 8, 128>}, {pipeline_mode = #tpu.pipeline_mode<synchronous>, transform_indices = @transform_1, window_bounds = array<i64: 1, 128>}, {pipeline_mode = #tpu.pipeline_mode<synchronous>, transform_indices = @transform_2, window_bounds = array<i64: 1, 128>}, {pipeline_mode = #tpu.pipeline_mode<synchronous>, transform_indices = @transform_3, window_bounds = array<i64: 128, 128>}, {transform_indices = @transform_4, window_bounds = array<i64: 8, 128>}, {pipeline_mode = #tpu.pipeline_mode<synchronous>, transform_indices = @transform_5, window_bounds = array<i64: 1, 128>}, {pipeline_mode = #tpu.pipeline_mode<synchronous>, transform_indices = @transform_6, window_bounds = array<i64: 1, 128>}]} {
    %c0 = arith.constant 0 : index
    %c0_0 = arith.constant 0 : index
    %0 = vector.load %arg1[%c0, %c0_0] : memref<8x128xbf16, #tpu.memory_space<vmem>>, vector<8x128xbf16>
    %1 = arith.extf %0 : vector<8x128xbf16> to vector<8x128xf32>
    %c0_1 = arith.constant 0 : index
    %c0_2 = arith.constant 0 : index
    %2 = vector.load %arg2[%c0_1, %c0_2] : memref<1x128xf32, #tpu.memory_space<vmem>>, vector<1x128xf32>
    %3 = vector.broadcast %2 : vector<1x128xf32> to vector<8x128xf32>
    %4 = arith.mulf %1, %3 : vector<8x128xf32>
    %c0_3 = arith.constant 0 : index
    %c0_4 = arith.constant 0 : index
    %5 = vector.load %arg3[%c0_3, %c0_4] : memref<1x128xf32, #tpu.memory_space<vmem>>, vector<1x128xf32>
    %6 = vector.broadcast %5 : vector<1x128xf32> to vector<8x128xf32>
    %7 = arith.addf %4, %6 : vector<8x128xf32>
    %cst = arith.constant 0.000000e+00 : f32
    %8 = vector.broadcast %cst : f32 to vector<8x128xf32>
    %9 = arith.maximumf %7, %8 : vector<8x128xf32>
    %10 = arith.truncf %9 : vector<8x128xf32> to vector<8x128xbf16>
    %c0_5 = arith.constant 0 : index
    %c0_6 = arith.constant 0 : index
    %11 = vector.load %arg4[%c0_5, %c0_6] : memref<128x128xbf16, #tpu.memory_space<vmem>>, vector<128x128xbf16>
    %cst_7 = arith.constant dense<0.000000e+00> : vector<8x128xf32>
    %12 = tpu.matmul %10, %11, %cst_7 {dimension_numbers = #tpu.dot_dimension_numbers<[1], [0], [0], [1], [0, 0, 1, 1], [], []>} : vector<8x128xbf16>, vector<128x128xbf16>, vector<8x128xf32> -> vector<8x128xf32>
    %13 = arith.truncf %12 : vector<8x128xf32> to vector<8x128xbf16>
    %c0_8 = arith.constant 0 : index
    %c0_9 = arith.constant 0 : index
    %14 = vector.load %arg5[%c0_8, %c0_9] : memref<8x128xbf16, #tpu.memory_space<vmem>>, vector<8x128xbf16>
    tpu.vector_store %arg5[%c0_8, %c0_9], %13 {strides = array<i32>} : memref<8x128xbf16, #tpu.memory_space<vmem>>, vector<8x128xbf16>,
    %15 = arith.extf %13 : vector<8x128xbf16> to vector<8x128xf32>
    %c0_i32 = arith.constant 0 : i32
    %16 = arith.cmpi eq, %arg0, %c0_i32 : i32
    %17 = arith.extui %16 : i1 to i32
    %c0_i32_10 = arith.constant 0 : i32
    %18 = arith.cmpi ne, %17, %c0_i32_10 : i32
    scf.if %18 {
      %cst_21 = arith.constant 0.000000e+00 : f32
      %30 = vector.broadcast %cst_21 : f32 to vector<1x128xf32>
      %c0_22 = arith.constant 0 : index
      %c0_23 = arith.constant 0 : index
      %31 = vector.load %arg6[%c0_22, %c0_23] : memref<1x128xf32, #tpu.memory_space<vmem>>, vector<1x128xf32>
      tpu.vector_store %arg6[%c0_22, %c0_23], %30 {strides = array<i32>} : memref<1x128xf32, #tpu.memory_space<vmem>>, vector<1x128xf32>,
      %cst_24 = arith.constant 0.000000e+00 : f32
      %32 = vector.broadcast %cst_24 : f32 to vector<1x128xf32>
      %c0_25 = arith.constant 0 : index
      %c0_26 = arith.constant 0 : index
      %33 = vector.load %arg7[%c0_25, %c0_26] : memref<1x128xf32, #tpu.memory_space<vmem>>, vector<1x128xf32>
      tpu.vector_store %arg7[%c0_25, %c0_26], %32 {strides = array<i32>} : memref<1x128xf32, #tpu.memory_space<vmem>>, vector<1x128xf32>,
    } else {
    }
    %c0_11 = arith.constant 0 : index
    %c0_12 = arith.constant 0 : index
    %19 = vector.load %arg6[%c0_11, %c0_12] : memref<1x128xf32, #tpu.memory_space<vmem>>, vector<1x128xf32>
    %cst_13 = arith.constant dense<0.000000e+00> : vector<128xf32>
    %20 = vector.multi_reduction <add>, %15, %cst_13 [0] : vector<8x128xf32> to vector<128xf32>
    %21 = vector.shape_cast %20 : vector<128xf32> to vector<1x128xf32>
    %22 = arith.addf %19, %21 : vector<1x128xf32>
    %c0_14 = arith.constant 0 : index
    %c0_15 = arith.constant 0 : index
    %23 = vector.load %arg6[%c0_14, %c0_15] : memref<1x128xf32, #tpu.memory_space<vmem>>, vector<1x128xf32>
    tpu.vector_store %arg6[%c0_14, %c0_15], %22 {strides = array<i32>} : memref<1x128xf32, #tpu.memory_space<vmem>>, vector<1x128xf32>,
    %c0_16 = arith.constant 0 : index
    %c0_17 = arith.constant 0 : index
    %24 = vector.load %arg7[%c0_16, %c0_17] : memref<1x128xf32, #tpu.memory_space<vmem>>, vector<1x128xf32>
    %25 = arith.mulf %15, %15 : vector<8x128xf32>
    %cst_18 = arith.constant dense<0.000000e+00> : vector<128xf32>
    %26 = vector.multi_reduction <add>, %25, %cst_18 [0] : vector<8x128xf32> to vector<128xf32>
    %27 = vector.shape_cast %26 : vector<128xf32> to vector<1x128xf32>
    %28 = arith.addf %24, %27 : vector<1x128xf32>
    %c0_19 = arith.constant 0 : index
    %c0_20 = arith.constant 0 : index
    %29 = vector.load %arg7[%c0_19, %c0_20] : memref<1x128xf32, #tpu.memory_space<vmem>>, vector<1x128xf32>
    tpu.vector_store %arg7[%c0_19, %c0_20], %28 {strides = array<i32>} : memref<1x128xf32, #tpu.memory_space<vmem>>, vector<1x128xf32>,
    return
  }
  func.func @transform_0(%arg0: i32) -> (i32, i32) {
    %c0_i32 = arith.constant 0 : i32
    %c0_i32_0 = arith.constant 0 : i32
    return %arg0, %c0_i32 : i32, i32
  }
  func.func @transform_1(%arg0: i32) -> (i32, i32) {
    %c0_i32 = arith.constant 0 : i32
    %c0_i32_0 = arith.constant 0 : i32
    %c0_i32_1 = arith.constant 0 : i32
    return %c0_i32, %c0_i32_0 : i32, i32
  }
  func.func @transform_2(%arg0: i32) -> (i32, i32) {
    %c0_i32 = arith.constant 0 : i32
    %c0_i32_0 = arith.constant 0 : i32
    %c0_i32_1 = arith.constant 0 : i32
    return %c0_i32, %c0_i32_0 : i32, i32
  }
  func.func @transform_3(%arg0: i32) -> (i32, i32) {
    %c0_i32 = arith.constant 0 : i32
    %c0_i32_0 = arith.constant 0 : i32
    %c0_i32_1 = arith.constant 0 : i32
    return %c0_i32, %c0_i32_0 : i32, i32
  }
  func.func @transform_4(%arg0: i32) -> (i32, i32) {
    %c0_i32 = arith.constant 0 : i32
    %c0_i32_0 = arith.constant 0 : i32
    return %arg0, %c0_i32 : i32, i32
  }
  func.func @transform_5(%arg0: i32) -> (i32, i32) {
    %c0_i32 = arith.constant 0 : i32
    %c0_i32_0 = arith.constant 0 : i32
    %c0_i32_1 = arith.constant 0 : i32
    return %c0_i32, %c0_i32_0 : i32, i32
  }
  func.func @transform_6(%arg0: i32) -> (i32, i32) {
    %c0_i32 = arith.constant 0 : i32
    %c0_i32_0 = arith.constant 0 : i32
    %c0_i32_1 = arith.constant 0 : i32
    return %c0_i32, %c0_i32_0 : i32, i32
  }
}

module attributes {stable_mosaic.version = 11 : i64} {
  func.func @kernel(%arg0: i32, %arg1: memref<8x16xf32, #tpu.memory_space<vmem>>, %arg2: memref<16x128xbf16, #tpu.memory_space<vmem>>, %arg3: memref<8x128xbf16, #tpu.memory_space<vmem>>, %arg4: memref<1x128xf32, #tpu.memory_space<vmem>>, %arg5: memref<1x128xf32, #tpu.memory_space<vmem>>) attributes {dimension_semantics = [#tpu.dimension_semantics<arbitrary>], iteration_bounds = array<i64: 1>, scalar_prefetch = 0 : i64, scratch_operands = 0 : i64, tpu.core_type = #tpu.core_type<tc>, window_params = [{transform_indices = @transform_0, window_bounds = array<i64: 8, 16>}, {pipeline_mode = #tpu.pipeline_mode<synchronous>, transform_indices = @transform_1, window_bounds = array<i64: 16, 128>}, {transform_indices = @transform_2, window_bounds = array<i64: 8, 128>}, {pipeline_mode = #tpu.pipeline_mode<synchronous>, transform_indices = @transform_3, window_bounds = array<i64: 1, 128>}, {pipeline_mode = #tpu.pipeline_mode<synchronous>, transform_indices = @transform_4, window_bounds = array<i64: 1, 128>}]} {
    %c0 = arith.constant 0 : index
    %c0_0 = arith.constant 0 : index
    %0 = vector.load %arg1[%c0, %c0_0] : memref<8x16xf32, #tpu.memory_space<vmem>>, vector<8x16xf32>
    %1 = arith.truncf %0 : vector<8x16xf32> to vector<8x16xbf16>
    %c0_1 = arith.constant 0 : index
    %c0_2 = arith.constant 0 : index
    %2 = vector.load %arg2[%c0_1, %c0_2] : memref<16x128xbf16, #tpu.memory_space<vmem>>, vector<16x128xbf16>
    %cst = arith.constant dense<0.000000e+00> : vector<8x128xf32>
    %3 = tpu.matmul %1, %2, %cst {dimension_numbers = #tpu.dot_dimension_numbers<[1], [0], [0], [1], [0, 0, 1, 1], [], []>} : vector<8x16xbf16>, vector<16x128xbf16>, vector<8x128xf32> -> vector<8x128xf32>
    %4 = arith.truncf %3 : vector<8x128xf32> to vector<8x128xbf16>
    %c0_3 = arith.constant 0 : index
    %c0_4 = arith.constant 0 : index
    %5 = vector.load %arg3[%c0_3, %c0_4] : memref<8x128xbf16, #tpu.memory_space<vmem>>, vector<8x128xbf16>
    tpu.vector_store %arg3[%c0_3, %c0_4], %4 {strides = array<i32>} : memref<8x128xbf16, #tpu.memory_space<vmem>>, vector<8x128xbf16>,
    %6 = arith.extf %4 : vector<8x128xbf16> to vector<8x128xf32>
    %c0_i32 = arith.constant 0 : i32
    %7 = arith.cmpi eq, %arg0, %c0_i32 : i32
    %8 = arith.extui %7 : i1 to i32
    %c0_i32_5 = arith.constant 0 : i32
    %9 = arith.cmpi ne, %8, %c0_i32_5 : i32
    scf.if %9 {
      %cst_16 = arith.constant 0.000000e+00 : f32
      %21 = vector.broadcast %cst_16 : f32 to vector<1x128xf32>
      %c0_17 = arith.constant 0 : index
      %c0_18 = arith.constant 0 : index
      %22 = vector.load %arg4[%c0_17, %c0_18] : memref<1x128xf32, #tpu.memory_space<vmem>>, vector<1x128xf32>
      tpu.vector_store %arg4[%c0_17, %c0_18], %21 {strides = array<i32>} : memref<1x128xf32, #tpu.memory_space<vmem>>, vector<1x128xf32>,
      %cst_19 = arith.constant 0.000000e+00 : f32
      %23 = vector.broadcast %cst_19 : f32 to vector<1x128xf32>
      %c0_20 = arith.constant 0 : index
      %c0_21 = arith.constant 0 : index
      %24 = vector.load %arg5[%c0_20, %c0_21] : memref<1x128xf32, #tpu.memory_space<vmem>>, vector<1x128xf32>
      tpu.vector_store %arg5[%c0_20, %c0_21], %23 {strides = array<i32>} : memref<1x128xf32, #tpu.memory_space<vmem>>, vector<1x128xf32>,
    } else {
    }
    %c0_6 = arith.constant 0 : index
    %c0_7 = arith.constant 0 : index
    %10 = vector.load %arg4[%c0_6, %c0_7] : memref<1x128xf32, #tpu.memory_space<vmem>>, vector<1x128xf32>
    %cst_8 = arith.constant dense<0.000000e+00> : vector<128xf32>
    %11 = vector.multi_reduction <add>, %6, %cst_8 [0] : vector<8x128xf32> to vector<128xf32>
    %12 = vector.shape_cast %11 : vector<128xf32> to vector<1x128xf32>
    %13 = arith.addf %10, %12 : vector<1x128xf32>
    %c0_9 = arith.constant 0 : index
    %c0_10 = arith.constant 0 : index
    %14 = vector.load %arg4[%c0_9, %c0_10] : memref<1x128xf32, #tpu.memory_space<vmem>>, vector<1x128xf32>
    tpu.vector_store %arg4[%c0_9, %c0_10], %13 {strides = array<i32>} : memref<1x128xf32, #tpu.memory_space<vmem>>, vector<1x128xf32>,
    %c0_11 = arith.constant 0 : index
    %c0_12 = arith.constant 0 : index
    %15 = vector.load %arg5[%c0_11, %c0_12] : memref<1x128xf32, #tpu.memory_space<vmem>>, vector<1x128xf32>
    %16 = arith.mulf %6, %6 : vector<8x128xf32>
    %cst_13 = arith.constant dense<0.000000e+00> : vector<128xf32>
    %17 = vector.multi_reduction <add>, %16, %cst_13 [0] : vector<8x128xf32> to vector<128xf32>
    %18 = vector.shape_cast %17 : vector<128xf32> to vector<1x128xf32>
    %19 = arith.addf %15, %18 : vector<1x128xf32>
    %c0_14 = arith.constant 0 : index
    %c0_15 = arith.constant 0 : index
    %20 = vector.load %arg5[%c0_14, %c0_15] : memref<1x128xf32, #tpu.memory_space<vmem>>, vector<1x128xf32>
    tpu.vector_store %arg5[%c0_14, %c0_15], %19 {strides = array<i32>} : memref<1x128xf32, #tpu.memory_space<vmem>>, vector<1x128xf32>,
    return
  }
  func.func @transform_0(%arg0: i32) -> (i32, i32) {
    %c0_i32 = arith.constant 0 : i32
    %c0_i32_0 = arith.constant 0 : i32
    return %arg0, %c0_i32 : i32, i32
  }
  func.func @transform_1(%arg0: i32) -> (i32, i32) {
    %c0_i32 = arith.constant 0 : i32
    %c0_i32_0 = arith.constant 0 : i32
    %c0_i32_1 = arith.constant 0 : i32
    return %c0_i32, %c0_i32_0 : i32, i32
  }
  func.func @transform_2(%arg0: i32) -> (i32, i32) {
    %c0_i32 = arith.constant 0 : i32
    %c0_i32_0 = arith.constant 0 : i32
    return %arg0, %c0_i32 : i32, i32
  }
  func.func @transform_3(%arg0: i32) -> (i32, i32) {
    %c0_i32 = arith.constant 0 : i32
    %c0_i32_0 = arith.constant 0 : i32
    %c0_i32_1 = arith.constant 0 : i32
    return %c0_i32, %c0_i32_0 : i32, i32
  }
  func.func @transform_4(%arg0: i32) -> (i32, i32) {
    %c0_i32 = arith.constant 0 : i32
    %c0_i32_0 = arith.constant 0 : i32
    %c0_i32_1 = arith.constant 0 : i32
    return %c0_i32, %c0_i32_0 : i32, i32
  }
}

module attributes {stable_mosaic.version = 11 : i64} {
  func.func @kernel(%arg0: i32, %arg1: memref<8x128xbf16, #tpu.memory_space<vmem>>, %arg2: memref<1x128xf32, #tpu.memory_space<vmem>>, %arg3: memref<1x128xf32, #tpu.memory_space<vmem>>, %arg4: memref<128x128xbf16, #tpu.memory_space<vmem>>, %arg5: memref<8x128xbf16, #tpu.memory_space<vmem>>, %arg6: memref<1x128xf32, #tpu.memory_space<vmem>>, %arg7: memref<1x128xf32, #tpu.memory_space<vmem>>) attributes {dimension_semantics = [#tpu.dimension_semantics<arbitrary>], iteration_bounds = array<i64: 1>, scalar_prefetch = 0 : i64, scratch_operands = 0 : i64, tpu.core_type = #tpu.core_type<tc>, window_params = [{transform_indices = @transform_0, window_bounds = array<i64: 8, 128>}, {pipeline_mode = #tpu.pipeline_mode<synchronous>, transform_indices = @transform_1, window_bounds = array<i64: 1, 128>}, {pipeline_mode = #tpu.pipeline_mode<synchronous>, transform_indices = @transform_2, window_bounds = array<i64: 1, 128>}, {pipeline_mode = #tpu.pipeline_mode<synchronous>, transform_indices = @transform_3, window_bounds = array<i64: 128, 128>}, {transform_indices = @transform_4, window_bounds = array<i64: 8, 128>}, {pipeline_mode = #tpu.pipeline_mode<synchronous>, transform_indices = @transform_5, window_bounds = array<i64: 1, 128>}, {pipeline_mode = #tpu.pipeline_mode<synchronous>, transform_indices = @transform_6, window_bounds = array<i64: 1, 128>}]} {
    %c0 = arith.constant 0 : index
    %c0_0 = arith.constant 0 : index
    %0 = vector.load %arg1[%c0, %c0_0] : memref<8x128xbf16, #tpu.memory_space<vmem>>, vector<8x128xbf16>
    %1 = arith.extf %0 : vector<8x128xbf16> to vector<8x128xf32>
    %c0_1 = arith.constant 0 : index
    %c0_2 = arith.constant 0 : index
    %2 = vector.load %arg2[%c0_1, %c0_2] : memref<1x128xf32, #tpu.memory_space<vmem>>, vector<1x128xf32>
    %3 = vector.broadcast %2 : vector<1x128xf32> to vector<8x128xf32>
    %4 = arith.mulf %1, %3 : vector<8x128xf32>
    %c0_3 = arith.constant 0 : index
    %c0_4 = arith.constant 0 : index
    %5 = vector.load %arg3[%c0_3, %c0_4] : memref<1x128xf32, #tpu.memory_space<vmem>>, vector<1x128xf32>
    %6 = vector.broadcast %5 : vector<1x128xf32> to vector<8x128xf32>
    %7 = arith.addf %4, %6 : vector<8x128xf32>
    %cst = arith.constant 0.000000e+00 : f32
    %8 = vector.broadcast %cst : f32 to vector<8x128xf32>
    %9 = arith.maximumf %7, %8 : vector<8x128xf32>
    %10 = arith.truncf %9 : vector<8x128xf32> to vector<8x128xbf16>
    %c0_5 = arith.constant 0 : index
    %c0_6 = arith.constant 0 : index
    %11 = vector.load %arg4[%c0_5, %c0_6] : memref<128x128xbf16, #tpu.memory_space<vmem>>, vector<128x128xbf16>
    %cst_7 = arith.constant dense<0.000000e+00> : vector<8x128xf32>
    %12 = tpu.matmul %10, %11, %cst_7 {dimension_numbers = #tpu.dot_dimension_numbers<[1], [0], [0], [1], [0, 0, 1, 1], [], []>} : vector<8x128xbf16>, vector<128x128xbf16>, vector<8x128xf32> -> vector<8x128xf32>
    %13 = arith.truncf %12 : vector<8x128xf32> to vector<8x128xbf16>
    %c0_8 = arith.constant 0 : index
    %c0_9 = arith.constant 0 : index
    %14 = vector.load %arg5[%c0_8, %c0_9] : memref<8x128xbf16, #tpu.memory_space<vmem>>, vector<8x128xbf16>
    tpu.vector_store %arg5[%c0_8, %c0_9], %13 {strides = array<i32>} : memref<8x128xbf16, #tpu.memory_space<vmem>>, vector<8x128xbf16>,
    %15 = arith.extf %13 : vector<8x128xbf16> to vector<8x128xf32>
    %c0_i32 = arith.constant 0 : i32
    %16 = arith.cmpi eq, %arg0, %c0_i32 : i32
    %17 = arith.extui %16 : i1 to i32
    %c0_i32_10 = arith.constant 0 : i32
    %18 = arith.cmpi ne, %17, %c0_i32_10 : i32
    scf.if %18 {
      %cst_21 = arith.constant 0.000000e+00 : f32
      %30 = vector.broadcast %cst_21 : f32 to vector<1x128xf32>
      %c0_22 = arith.constant 0 : index
      %c0_23 = arith.constant 0 : index
      %31 = vector.load %arg6[%c0_22, %c0_23] : memref<1x128xf32, #tpu.memory_space<vmem>>, vector<1x128xf32>
      tpu.vector_store %arg6[%c0_22, %c0_23], %30 {strides = array<i32>} : memref<1x128xf32, #tpu.memory_space<vmem>>, vector<1x128xf32>,
      %cst_24 = arith.constant 0.000000e+00 : f32
      %32 = vector.broadcast %cst_24 : f32 to vector<1x128xf32>
      %c0_25 = arith.constant 0 : index
      %c0_26 = arith.constant 0 : index
      %33 = vector.load %arg7[%c0_25, %c0_26] : memref<1x128xf32, #tpu.memory_space<vmem>>, vector<1x128xf32>
      tpu.vector_store %arg7[%c0_25, %c0_26], %32 {strides = array<i32>} : memref<1x128xf32, #tpu.memory_space<vmem>>, vector<1x128xf32>,
    } else {
    }
    %c0_11 = arith.constant 0 : index
    %c0_12 = arith.constant 0 : index
    %19 = vector.load %arg6[%c0_11, %c0_12] : memref<1x128xf32, #tpu.memory_space<vmem>>, vector<1x128xf32>
    %cst_13 = arith.constant dense<0.000000e+00> : vector<128xf32>
    %20 = vector.multi_reduction <add>, %15, %cst_13 [0] : vector<8x128xf32> to vector<128xf32>
    %21 = vector.shape_cast %20 : vector<128xf32> to vector<1x128xf32>
    %22 = arith.addf %19, %21 : vector<1x128xf32>
    %c0_14 = arith.constant 0 : index
    %c0_15 = arith.constant 0 : index
    %23 = vector.load %arg6[%c0_14, %c0_15] : memref<1x128xf32, #tpu.memory_space<vmem>>, vector<1x128xf32>
    tpu.vector_store %arg6[%c0_14, %c0_15], %22 {strides = array<i32>} : memref<1x128xf32, #tpu.memory_space<vmem>>, vector<1x128xf32>,
    %c0_16 = arith.constant 0 : index
    %c0_17 = arith.constant 0 : index
    %24 = vector.load %arg7[%c0_16, %c0_17] : memref<1x128xf32, #tpu.memory_space<vmem>>, vector<1x128xf32>
    %25 = arith.mulf %15, %15 : vector<8x128xf32>
    %cst_18 = arith.constant dense<0.000000e+00> : vector<128xf32>
    %26 = vector.multi_reduction <add>, %25, %cst_18 [0] : vector<8x128xf32> to vector<128xf32>
    %27 = vector.shape_cast %26 : vector<128xf32> to vector<1x128xf32>
    %28 = arith.addf %24, %27 : vector<1x128xf32>
    %c0_19 = arith.constant 0 : index
    %c0_20 = arith.constant 0 : index
    %29 = vector.load %arg7[%c0_19, %c0_20] : memref<1x128xf32, #tpu.memory_space<vmem>>, vector<1x128xf32>
    tpu.vector_store %arg7[%c0_19, %c0_20], %28 {strides = array<i32>} : memref<1x128xf32, #tpu.memory_space<vmem>>, vector<1x128xf32>,
    return
  }
  func.func @transform_0(%arg0: i32) -> (i32, i32) {
    %c0_i32 = arith.constant 0 : i32
    %c0_i32_0 = arith.constant 0 : i32
    return %arg0, %c0_i32 : i32, i32
  }
  func.func @transform_1(%arg0: i32) -> (i32, i32) {
    %c0_i32 = arith.constant 0 : i32
    %c0_i32_0 = arith.constant 0 : i32
    %c0_i32_1 = arith.constant 0 : i32
    return %c0_i32, %c0_i32_0 : i32, i32
  }
  func.func @transform_2(%arg0: i32) -> (i32, i32) {
    %c0_i32 = arith.constant 0 : i32
    %c0_i32_0 = arith.constant 0 : i32
    %c0_i32_1 = arith.constant 0 : i32
    return %c0_i32, %c0_i32_0 : i32, i32
  }
  func.func @transform_3(%arg0: i32) -> (i32, i32) {
    %c0_i32 = arith.constant 0 : i32
    %c0_i32_0 = arith.constant 0 : i32
    %c0_i32_1 = arith.constant 0 : i32
    return %c0_i32, %c0_i32_0 : i32, i32
  }
  func.func @transform_4(%arg0: i32) -> (i32, i32) {
    %c0_i32 = arith.constant 0 : i32
    %c0_i32_0 = arith.constant 0 : i32
    return %arg0, %c0_i32 : i32, i32
  }
  func.func @transform_5(%arg0: i32) -> (i32, i32) {
    %c0_i32 = arith.constant 0 : i32
    %c0_i32_0 = arith.constant 0 : i32
    %c0_i32_1 = arith.constant 0 : i32
    return %c0_i32, %c0_i32_0 : i32, i32
  }
  func.func @transform_6(%arg0: i32) -> (i32, i32) {
    %c0_i32 = arith.constant 0 : i32
    %c0_i32_0 = arith.constant 0 : i32
    %c0_i32_1 = arith.constant 0 : i32
    return %c0_i32, %c0_i32_0 : i32, i32
  }
}

module attributes {stable_mosaic.version = 11 : i64} {
  func.func @kernel(%arg0: i32, %arg1: memref<8x128xbf16, #tpu.memory_space<vmem>>, %arg2: memref<1x128xf32, #tpu.memory_space<vmem>>, %arg3: memref<1x128xf32, #tpu.memory_space<vmem>>, %arg4: memref<128x128xbf16, #tpu.memory_space<vmem>>, %arg5: memref<1x128xf32, #tpu.memory_space<vmem>>, %arg6: memref<8x128xf32, #tpu.memory_space<vmem>>) attributes {dimension_semantics = [#tpu.dimension_semantics<parallel>], iteration_bounds = array<i64: 1>, scalar_prefetch = 0 : i64, scratch_operands = 0 : i64, tpu.core_type = #tpu.core_type<tc>, window_params = [{transform_indices = @transform_0, window_bounds = array<i64: 8, 128>}, {pipeline_mode = #tpu.pipeline_mode<synchronous>, transform_indices = @transform_1, window_bounds = array<i64: 1, 128>}, {pipeline_mode = #tpu.pipeline_mode<synchronous>, transform_indices = @transform_2, window_bounds = array<i64: 1, 128>}, {pipeline_mode = #tpu.pipeline_mode<synchronous>, transform_indices = @transform_3, window_bounds = array<i64: 128, 128>}, {pipeline_mode = #tpu.pipeline_mode<synchronous>, transform_indices = @transform_4, window_bounds = array<i64: 1, 128>}, {transform_indices = @transform_5, window_bounds = array<i64: 8, 128>}]} {
    %c0 = arith.constant 0 : index
    %c0_0 = arith.constant 0 : index
    %0 = vector.load %arg1[%c0, %c0_0] : memref<8x128xbf16, #tpu.memory_space<vmem>>, vector<8x128xbf16>
    %1 = arith.extf %0 : vector<8x128xbf16> to vector<8x128xf32>
    %c0_1 = arith.constant 0 : index
    %c0_2 = arith.constant 0 : index
    %2 = vector.load %arg2[%c0_1, %c0_2] : memref<1x128xf32, #tpu.memory_space<vmem>>, vector<1x128xf32>
    %3 = vector.broadcast %2 : vector<1x128xf32> to vector<8x128xf32>
    %4 = arith.mulf %1, %3 : vector<8x128xf32>
    %c0_3 = arith.constant 0 : index
    %c0_4 = arith.constant 0 : index
    %5 = vector.load %arg3[%c0_3, %c0_4] : memref<1x128xf32, #tpu.memory_space<vmem>>, vector<1x128xf32>
    %6 = vector.broadcast %5 : vector<1x128xf32> to vector<8x128xf32>
    %7 = arith.addf %4, %6 : vector<8x128xf32>
    %cst = arith.constant 0.000000e+00 : f32
    %8 = vector.broadcast %cst : f32 to vector<8x128xf32>
    %9 = arith.maximumf %7, %8 : vector<8x128xf32>
    %10 = arith.truncf %9 : vector<8x128xf32> to vector<8x128xbf16>
    %c0_5 = arith.constant 0 : index
    %c0_6 = arith.constant 0 : index
    %11 = vector.load %arg4[%c0_5, %c0_6] : memref<128x128xbf16, #tpu.memory_space<vmem>>, vector<128x128xbf16>
    %cst_7 = arith.constant dense<0.000000e+00> : vector<8x128xf32>
    %12 = tpu.matmul %10, %11, %cst_7 {dimension_numbers = #tpu.dot_dimension_numbers<[1], [0], [0], [1], [0, 0, 1, 1], [], []>} : vector<8x128xbf16>, vector<128x128xbf16>, vector<8x128xf32> -> vector<8x128xf32>
    %c0_8 = arith.constant 0 : index
    %c0_9 = arith.constant 0 : index
    %13 = vector.load %arg5[%c0_8, %c0_9] : memref<1x128xf32, #tpu.memory_space<vmem>>, vector<1x128xf32>
    %14 = vector.broadcast %13 : vector<1x128xf32> to vector<8x128xf32>
    %15 = arith.addf %12, %14 : vector<8x128xf32>
    %c0_10 = arith.constant 0 : index
    %c0_11 = arith.constant 0 : index
    %16 = vector.load %arg6[%c0_10, %c0_11] : memref<8x128xf32, #tpu.memory_space<vmem>>, vector<8x128xf32>
    tpu.vector_store %arg6[%c0_10, %c0_11], %15 {strides = array<i32>} : memref<8x128xf32, #tpu.memory_space<vmem>>, vector<8x128xf32>,
    return
  }
  func.func @transform_0(%arg0: i32) -> (i32, i32) {
    %c0_i32 = arith.constant 0 : i32
    %c0_i32_0 = arith.constant 0 : i32
    return %arg0, %c0_i32 : i32, i32
  }
  func.func @transform_1(%arg0: i32) -> (i32, i32) {
    %c0_i32 = arith.constant 0 : i32
    %c0_i32_0 = arith.constant 0 : i32
    %c0_i32_1 = arith.constant 0 : i32
    return %c0_i32, %c0_i32_0 : i32, i32
  }
  func.func @transform_2(%arg0: i32) -> (i32, i32) {
    %c0_i32 = arith.constant 0 : i32
    %c0_i32_0 = arith.constant 0 : i32
    %c0_i32_1 = arith.constant 0 : i32
    return %c0_i32, %c0_i32_0 : i32, i32
  }
  func.func @transform_3(%arg0: i32) -> (i32, i32) {
    %c0_i32 = arith.constant 0 : i32
    %c0_i32_0 = arith.constant 0 : i32
    %c0_i32_1 = arith.constant 0 : i32
    return %c0_i32, %c0_i32_0 : i32, i32
  }
  func.func @transform_4(%arg0: i32) -> (i32, i32) {
    %c0_i32 = arith.constant 0 : i32
    %c0_i32_0 = arith.constant 0 : i32
    %c0_i32_1 = arith.constant 0 : i32
    return %c0_i32, %c0_i32_0 : i32, i32
  }
  func.func @transform_5(%arg0: i32) -> (i32, i32) {
    %c0_i32 = arith.constant 0 : i32
    %c0_i32_0 = arith.constant 0 : i32
    return %arg0, %c0_i32 : i32, i32
  }
}

</mosaic_0001>

<llo_original>
// kernel: mlp_pallas.4
$region0: #{mlp_pallas.4}
  #allocation0 [shape = 'u32[]', space=smem, size = 0x4, offset = 0x4, fixed_abs, tag = 'smem constant byte address 0x4 - core index']
  #allocation1 [shape = 'u32[144,128]{1,0:T(1,128)}', space=vmem, size = 0x12000, scoped, tag = 'internal scratch']
  %s0 = inlined_call_operand.hbm [shape: f32[8,16], index: 0, kind: input, shape index: {}]
  %s1 = inlined_call_operand.hbm [shape: bf16[16,128], index: 1, kind: input, shape index: {}]
  %s2 = inlined_call_operand.vmem [shape: bf16[8,128], index: 2, kind: output, shape index: {0}]
  %s3 = inlined_call_operand.vmem [shape: f32[1,128], index: 3, kind: output, shape index: {1}]
  %s4 = inlined_call_operand.vmem [shape: f32[1,128], index: 4, kind: output, shape index: {2}]
  %5 = xla_tuple %s2, %s3, %s4
  %s6 = sld [smem:[#allocation0]]
  $region46: #{mlp_pallas.4} parent=0
    _
  %s8 = ssub.s32 1, %s6
  %s9 = scalar_select 0, %s8, %s6
  $region1: #{mlp_pallas.4} parent=0
    #allocation2 [shape = 'u8[4096]{0}', space=vmem, size = 0x1000, scoped, tag = 'input window, operand 0, single buffered']
    #allocation3 [shape = 's32[1]{0}', space=sflag, size = 0x4, scoped, tag = 'scoped memory for mlp_pallas.4']
    #allocation4 [shape = 'u8[4096]{0}', space=vmem, size = 0x1000, scoped, tag = 'input window, operand 1, single buffered']
    #allocation5 [shape = 's32[1]{0}', space=sflag, size = 0x4, scoped, tag = 'scoped memory for mlp_pallas.4']
    %10 = vsyncpa [#allocation3], 0
    %11 = vsyncpa [#allocation5], 0
    // Predicated region
    $region2: #{mlp_pallas.4} parent=1 // pred_check
      _
    $region3: #{mlp_pallas.4} parent=1 // pred_check_branch
      %13 = sbr.rel (0) target = $region5
    $region4: #{mlp_pallas.4} parent=1 // pred_region
      %s15 = ssub.s32 128, 128
      %16 = vsyncadd [#allocation3], %s15
      %s18 = sshll.u32 [#allocation2], 4
      %s19 = int_to_ptr.vmem [resolvable:$true] %s18
      %21 = dma.hbm_to_vmem [thread:$0]  %s0, 128, %s19, [#allocation3]
    $region5: #{mlp_pallas.4} parent=1 // pred_fallthru
      _
    // Predicated region
    $region6: #{mlp_pallas.4} parent=1 // pred_check
      _
    $region7: #{mlp_pallas.4} parent=1 // pred_check_branch
      %23 = sbr.rel (0) target = $region9
    $region8: #{mlp_pallas.4} parent=1 // pred_region
      %s25 = ssub.s32 128, 128
      %26 = vsyncadd [#allocation5], %s25
      %s27 = sshll.u32 [#allocation4], 4
      %s28 = int_to_ptr.vmem [resolvable:$true] %s27
      %33 = dma.hbm_to_vmem [thread:$0]  %s1, 128, %s28, [#allocation5], 64, 64, 4
    $region9: #{mlp_pallas.4} parent=1 // pred_fallthru
      _
    // Predicated region
    $region10: #{mlp_pallas.4} parent=1 // pred_check
      _
    $region11: #{mlp_pallas.4} parent=1 // pred_check_branch
      %35 = sbr.rel (0) target = $region13
    $region12: #{mlp_pallas.4} parent=1 // pred_region
      %36 = dma.done [#allocation3], 128
    $region13: #{mlp_pallas.4} parent=1 // pred_fallthru
      _
    // Predicated region
    $region14: #{mlp_pallas.4} parent=1 // pred_check
      _
    $region15: #{mlp_pallas.4} parent=1 // pred_check_branch
      %38 = sbr.rel (0) target = $region17
    $region16: #{mlp_pallas.4} parent=1 // pred_region
      %39 = dma.done [#allocation5], 128
    $region17: #{mlp_pallas.4} parent=1 // pred_fallthru
      _
    %v41 = vld [vmem:[#allocation2] sm:$0xff]
    %v42 = vpack.c.bf16 %v41, %v41
    %v43 = vld [vmem:[#allocation4] sm:$0xf]
    %v44 = vld [vmem:[#allocation4 + $0x4] sm:$0xf]
    %v47 = vunpack.c.l.b16 %v43
    %v48 = vunpack.c.l.b16 %v44
    %v49 = vpack.c.b16 %v48, %v47
    %vm51 = vcmask 130048
    %v53 = vsel %vm51, %v42, 0
    %55 = vmatprep.subr.bf16.mxu0 0
    %56 = vmatpush1.bf16.msra.mxu0 0
    %57 = vmatprep.subr.bf16.mxu0 0
    %58 = vmatpush1.bf16.msra.mxu0 0
    %59 = vmatprep.subr.bf16.mxu0 0
    %60 = vmatpush1.bf16.msra.mxu0 0
    %61 = vmatprep.subr.bf16.mxu0 0
    %62 = vmatpush1.bf16.msra.mxu0 0
    %63 = vmatprep.subr.bf16.mxu0 0
    %64 = vmatpush1.bf16.msra.mxu0 0
    %65 = vmatprep.subr.bf16.mxu0 0
    %66 = vmatpush1.bf16.msra.mxu0 0
    %67 = vmatprep.subr.bf16.mxu0 0
    %68 = vmatpush1.bf16.msra.mxu0 0
    %69 = vmatprep.subr.bf16.mxu0 0
    %70 = vmatpush1.bf16.msra.mxu0 %v49
    %71 = vmatprep.subr.bf16.mxu0 0
    %72 = vmatpush2.bf16.msra.mxu0 0
    %73 = vmatprep.subr.bf16.mxu0 0
    %74 = vmatpush2.bf16.msra.mxu0 0
    %75 = vmatprep.subr.bf16.mxu0 0
    %76 = vmatpush2.bf16.msra.mxu0 0
    %77 = vmatprep.subr.bf16.mxu0 0
    %78 = vmatpush2.bf16.msra.mxu0 0
    %79 = vmatprep.subr.bf16.mxu0 0
    %80 = vmatpush2.bf16.msra.mxu0 0
    %81 = vmatprep.subr.bf16.mxu0 0
    %82 = vmatpush2.bf16.msra.mxu0 0
    %83 = vmatprep.subr.bf16.mxu0 0
    %84 = vmatpush2.bf16.msra.mxu0 0
    %85 = vmatprep.subr.bf16.mxu0 0
    %86 = vmatpush2.bf16.msra.mxu0 0
    %87 = vmatprep.mubr.bf16.mxu0 0
    %88 = vmatmul.mubr.bf16.gmra.mxu0 %v53
    %v89 = vpop.f32.mrf.mxu0
    %v90 = vadd.f32 0.0, %v89
    %v91 = vpop.f32.mrf.mxu0
    %v92 = vpop.f32.mrf.mxu0
    %v93 = vpop.f32.mrf.mxu0
    %94 = vdwg.mxu0
    %v95 = vpack.c.bf16 %v90, %v90
    %96 = vst [vmem:[%s2] sm:$0xf] %v95
    %v97 = vunpack.c.l.bf16 %v95
    %p98 = scmp.eq.s32.totalorder 0, 0
    // Predicated region
    $region18: #{mlp_pallas.4} parent=1 // pred_check
      %p99 = pneg %p98
    $region19: #{mlp_pallas.4} parent=1 // pred_check_branch
      %101 = sbr.rel (%p99) target = $region21
    $region20: #{mlp_pallas.4} parent=1 // pred_region
      %102 = vst [vmem:[%s3] sm:$0x1] 0.0
      %103 = vst [vmem:[%s4] sm:$0x1] 0.0
    $region21: #{mlp_pallas.4} parent=1 // pred_fallthru
      _
    %v104 = vld [vmem:[%s3] sm:$0x1]
    %v105 = vrot.slane %v97, 4
    %v106 = vadd.f32 %v97, %v105
    %v107 = vrot.slane %v106, 2
    %v108 = vadd.f32 %v106, %v107
    %v109 = vrot.slane %v108, 1
    %v110 = vadd.f32 %v108, %v109
    %v111 = vadd.f32 %v104, %v110
    %112 = vst [vmem:[%s3] sm:$0x1] %v111
    %v113 = vld [vmem:[%s4] sm:$0x1]
    %v114 = vmul.f32 %v97, %v97
    %v115 = vrot.slane %v114, 4
    %v116 = vadd.f32 %v114, %v115
    %v117 = vrot.slane %v116, 2
    %v118 = vadd.f32 %v116, %v117
    %v119 = vrot.slane %v118, 1
    %v120 = vadd.f32 %v118, %v119
    %v121 = vadd.f32 %v113, %v120
    %122 = vst [vmem:[%s4] sm:$0x1] %v121
    // Predicated region
    $region22: #{mlp_pallas.4} parent=1 // pred_check
      _
    $region23: #{mlp_pallas.4} parent=1 // pred_check_branch
      %124 = sbr.rel (0) target = $region25
    $region24: #{mlp_pallas.4} parent=1 // pred_region
      _
    $region25: #{mlp_pallas.4} parent=1 // pred_fallthru
      _
    // Predicated region
    $region26: #{mlp_pallas.4} parent=1 // pred_check
      _
    $region27: #{mlp_pallas.4} parent=1 // pred_check_branch
      %126 = sbr.rel (0) target = $region29
    $region28: #{mlp_pallas.4} parent=1 // pred_region
      _
    $region29: #{mlp_pallas.4} parent=1 // pred_fallthru
      _
    // Predicated region
    $region30: #{mlp_pallas.4} parent=1 // pred_check
      _
    $region31: #{mlp_pallas.4} parent=1 // pred_check_branch
      %128 = sbr.rel (0) target = $region33
    $region32: #{mlp_pallas.4} parent=1 // pred_region
      _
    $region33: #{mlp_pallas.4} parent=1 // pred_fallthru
      _
    // Predicated region
    $region34: #{mlp_pallas.4} parent=1 // pred_check
      _
    $region35: #{mlp_pallas.4} parent=1 // pred_check_branch
      %130 = sbr.rel (0) target = $region37
    $region36: #{mlp_pallas.4} parent=1 // pred_region
      _
    $region37: #{mlp_pallas.4} parent=1 // pred_fallthru
      _
    // Predicated region
    $region38: #{mlp_pallas.4} parent=1 // pred_check
      _
    $region39: #{mlp_pallas.4} parent=1 // pred_check_branch
      %132 = sbr.rel (0) target = $region41
    $region40: #{mlp_pallas.4} parent=1 // pred_region
      _
    $region41: #{mlp_pallas.4} parent=1 // pred_fallthru
      _
    // Predicated region
    $region42: #{mlp_pallas.4} parent=1 // pred_check
      _
    $region43: #{mlp_pallas.4} parent=1 // pred_check_branch
      %134 = sbr.rel (0) target = $region45
    $region44: #{mlp_pallas.4} parent=1 // pred_region
      _
    $region45: #{mlp_pallas.4} parent=1 // pred_fallthru
      _
    %135 = vsyncpa [#allocation3], 1
    %136 = vsyncpa [#allocation5], 1

// kernel: mlp_pallas.6
$region0: #{mlp_pallas.6}
  #allocation0 [shape = 'u32[]', space=smem, size = 0x4, offset = 0x4, fixed_abs, tag = 'smem constant byte address 0x4 - core index']
  #allocation1 [shape = 'u32[144,128]{1,0:T(1,128)}', space=vmem, size = 0x12000, scoped, tag = 'internal scratch']
  %s0 = inlined_call_operand.vmem [shape: bf16[8,128], index: 0, kind: input, shape index: {}]
  %s1 = inlined_call_operand.vmem [shape: f32[1,128], index: 1, kind: input, shape index: {}]
  %s2 = inlined_call_operand.vmem [shape: f32[1,128], index: 2, kind: input, shape index: {}]
  %s3 = inlined_call_operand.vmem [shape: bf16[128,128], index: 3, kind: input, shape index: {}]
  %s4 = inlined_call_operand.vmem [shape: bf16[8,128], index: 4, kind: output, shape index: {0}]
  %s5 = inlined_call_operand.vmem [shape: f32[1,128], index: 5, kind: output, shape index: {1}]
  %s6 = inlined_call_operand.vmem [shape: f32[1,128], index: 6, kind: output, shape index: {2}]
  %7 = xla_tuple %s4, %s5, %s6
  %s8 = sld [smem:[#allocation0]]
  $region46: #{mlp_pallas.6} parent=0
    _
  %s10 = ssub.s32 1, %s8
  %s11 = scalar_select 0, %s10, %s8
  // Predicated region
  $region2: #{mlp_pallas.6} parent=0 // pred_check
    _
  $region3: #{mlp_pallas.6} parent=0 // pred_check_branch
    %13 = sbr.rel (0) target = $region5
  $region4: #{mlp_pallas.6} parent=0 // pred_region
    _
  $region5: #{mlp_pallas.6} parent=0 // pred_fallthru
    _
  // Predicated region
  $region6: #{mlp_pallas.6} parent=0 // pred_check
    _
  $region7: #{mlp_pallas.6} parent=0 // pred_check_branch
    %15 = sbr.rel (0) target = $region9
  $region8: #{mlp_pallas.6} parent=0 // pred_region
    _
  $region9: #{mlp_pallas.6} parent=0 // pred_fallthru
    _
  // Predicated region
  $region10: #{mlp_pallas.6} parent=0 // pred_check
    _
  $region11: #{mlp_pallas.6} parent=0 // pred_check_branch
    %17 = sbr.rel (0) target = $region13
  $region12: #{mlp_pallas.6} parent=0 // pred_region
    _
  $region13: #{mlp_pallas.6} parent=0 // pred_fallthru
    _
  // Predicated region
  $region14: #{mlp_pallas.6} parent=0 // pred_check
    _
  $region15: #{mlp_pallas.6} parent=0 // pred_check_branch
    %19 = sbr.rel (0) target = $region17
  $region16: #{mlp_pallas.6} parent=0 // pred_region
    _
  $region17: #{mlp_pallas.6} parent=0 // pred_fallthru
    _
  %v21 = vld [vmem:[%s0] sm:$0xf]
  %v22 = vunpack.c.l.bf16 %v21
  %v23 = vld [vmem:[%s1] sm:$0x1]
  %v25 = vlaneseq
  %v26 = vshrl.u32 %v25, 7
  %v27 = vsub.s32 0, %v26
  %v28 = vrot.slane %v23, %v27
  %v30 = vmul.f32 %v22, %v28
  %v31 = vld [vmem:[%s2] sm:$0x1]
  %v33 = vlaneseq
  %v34 = vshrl.u32 %v33, 7
  %v35 = vsub.s32 0, %v34
  %v36 = vrot.slane %v31, %v35
  %v38 = vadd.f32 %v30, %v36
  %v39 = vmax.f32 %v38, 0.0
  %v40 = vpack.c.bf16 %v39, %v39
  %v41 = vld [vmem:[%s3] sm:$0xf]
  %v42 = vld [vmem:[%s3 + $0x4] sm:$0xf]
  %v43 = vld [vmem:[%s3 + $0x8] sm:$0xf]
  %v44 = vld [vmem:[%s3 + $0xc] sm:$0xf]
  %v45 = vld [vmem:[%s3 + $0x10] sm:$0xf]
  %v46 = vld [vmem:[%s3 + $0x14] sm:$0xf]
  %v47 = vld [vmem:[%s3 + $0x18] sm:$0xf]
  %v48 = vld [vmem:[%s3 + $0x1c] sm:$0xf]
  %v49 = vld [vmem:[%s3 + $0x20] sm:$0xf]
  %v50 = vld [vmem:[%s3 + $0x24] sm:$0xf]
  %v51 = vld [vmem:[%s3 + $0x28] sm:$0xf]
  %v52 = vld [vmem:[%s3 + $0x2c] sm:$0xf]
  %v53 = vld [vmem:[%s3 + $0x30] sm:$0xf]
  %v54 = vld [vmem:[%s3 + $0x34] sm:$0xf]
  %v55 = vld [vmem:[%s3 + $0x38] sm:$0xf]
  %v56 = vld [vmem:[%s3 + $0x3c] sm:$0xf]
  %v73 = vunpack.c.l.b16 %v41
  %v74 = vunpack.c.l.b16 %v42
  %v75 = vunpack.c.l.b16 %v43
  %v76 = vunpack.c.l.b16 %v44
  %v77 = vunpack.c.l.b16 %v45
  %v78 = vunpack.c.l.b16 %v46
  %v79 = vunpack.c.l.b16 %v47
  %v80 = vunpack.c.l.b16 %v48
  %v81 = vunpack.c.l.b16 %v49
  %v82 = vunpack.c.l.b16 %v50
  %v83 = vunpack.c.l.b16 %v51
  %v84 = vunpack.c.l.b16 %v52
  %v85 = vunpack.c.l.b16 %v53
  %v86 = vunpack.c.l.b16 %v54
  %v87 = vunpack.c.l.b16 %v55
  %v88 = vunpack.c.l.b16 %v56
  %v89 = vpack.c.b16 %v74, %v73
  %v90 = vpack.c.b16 %v76, %v75
  %v91 = vpack.c.b16 %v78, %v77
  %v92 = vpack.c.b16 %v80, %v79
  %v93 = vpack.c.b16 %v82, %v81
  %v94 = vpack.c.b16 %v84, %v83
  %v95 = vpack.c.b16 %v86, %v85
  %v96 = vpack.c.b16 %v88, %v87
  %105 = vmatprep.subr.bf16.mxu0 0
  %106 = vmatpush1.bf16.msra.mxu0 %v96
  %107 = vmatprep.subr.bf16.mxu0 0
  %108 = vmatpush1.bf16.msra.mxu0 %v95
  %109 = vmatprep.subr.bf16.mxu0 0
  %110 = vmatpush1.bf16.msra.mxu0 %v94
  %111 = vmatprep.subr.bf16.mxu0 0
  %112 = vmatpush1.bf16.msra.mxu0 %v93
  %113 = vmatprep.subr.bf16.mxu0 0
  %114 = vmatpush1.bf16.msra.mxu0 %v92
  %115 = vmatprep.subr.bf16.mxu0 0
  %116 = vmatpush1.bf16.msra.mxu0 %v91
  %117 = vmatprep.subr.bf16.mxu0 0
  %118 = vmatpush1.bf16.msra.mxu0 %v90
  %119 = vmatprep.subr.bf16.mxu0 0
  %120 = vmatpush1.bf16.msra.mxu0 %v89
  %121 = vmatprep.subr.bf16.mxu0 0
  %122 = vmatpush2.bf16.msra.mxu0 0
  %123 = vmatprep.subr.bf16.mxu0 0
  %124 = vmatpush2.bf16.msra.mxu0 0
  %125 = vmatprep.subr.bf16.mxu0 0
  %126 = vmatpush2.bf16.msra.mxu0 0
  %127 = vmatprep.subr.bf16.mxu0 0
  %128 = vmatpush2.bf16.msra.mxu0 0
  %129 = vmatprep.subr.bf16.mxu0 0
  %130 = vmatpush2.bf16.msra.mxu0 0
  %131 = vmatprep.subr.bf16.mxu0 0
  %132 = vmatpush2.bf16.msra.mxu0 0
  %133 = vmatprep.subr.bf16.mxu0 0
  %134 = vmatpush2.bf16.msra.mxu0 0
  %135 = vmatprep.subr.bf16.mxu0 0
  %136 = vmatpush2.bf16.msra.mxu0 0
  %137 = vmatprep.mubr.bf16.mxu0 0
  %138 = vmatmul.mubr.bf16.gmra.mxu0 %v40
  %v139 = vpop.f32.mrf.mxu0
  %v140 = vadd.f32 0.0, %v139
  %v141 = vpop.f32.mrf.mxu0
  %v142 = vpop.f32.mrf.mxu0
  %v143 = vpop.f32.mrf.mxu0
  %144 = vdwg.mxu0
  %v145 = vpack.c.bf16 %v140, %v140
  %146 = vst [vmem:[%s4] sm:$0xf] %v145
  %v147 = vunpack.c.l.bf16 %v145
  %p148 = scmp.eq.s32.totalorder 0, 0
  // Predicated region
  $region18: #{mlp_pallas.6} parent=0 // pred_check
    %p149 = pneg %p148
  $region19: #{mlp_pallas.6} parent=0 // pred_check_branch
    %151 = sbr.rel (%p149) target = $region21
  $region20: #{mlp_pallas.6} parent=0 // pred_region
    %152 = vst [vmem:[%s5] sm:$0x1] 0.0
    %153 = vst [vmem:[%s6] sm:$0x1] 0.0
  $region21: #{mlp_pallas.6} parent=0 // pred_fallthru
    _
  %v154 = vld [vmem:[%s5] sm:$0x1]
  %v155 = vrot.slane %v147, 4
  %v156 = vadd.f32 %v147, %v155
  %v157 = vrot.slane %v156, 2
  %v158 = vadd.f32 %v156, %v157
  %v159 = vrot.slane %v158, 1
  %v160 = vadd.f32 %v158, %v159
  %v161 = vadd.f32 %v154, %v160
  %162 = vst [vmem:[%s5] sm:$0x1] %v161
  %v163 = vld [vmem:[%s6] sm:$0x1]
  %v164 = vmul.f32 %v147, %v147
  %v165 = vrot.slane %v164, 4
  %v166 = vadd.f32 %v164, %v165
  %v167 = vrot.slane %v166, 2
  %v168 = vadd.f32 %v166, %v167
  %v169 = vrot.slane %v168, 1
  %v170 = vadd.f32 %v168, %v169
  %v171 = vadd.f32 %v163, %v170
  %172 = vst [vmem:[%s6] sm:$0x1] %v171
  // Predicated region
  $region22: #{mlp_pallas.6} parent=0 // pred_check
    _
  $region23: #{mlp_pallas.6} parent=0 // pred_check_branch
    %174 = sbr.rel (0) target = $region25
  $region24: #{mlp_pallas.6} parent=0 // pred_region
    _
  $region25: #{mlp_pallas.6} parent=0 // pred_fallthru
    _
  // Predicated region
  $region26: #{mlp_pallas.6} parent=0 // pred_check
    _
  $region27: #{mlp_pallas.6} parent=0 // pred_check_branch
    %176 = sbr.rel (0) target = $region29
  $region28: #{mlp_pallas.6} parent=0 // pred_region
    _
  $region29: #{mlp_pallas.6} parent=0 // pred_fallthru
    _
  // Predicated region
  $region30: #{mlp_pallas.6} parent=0 // pred_check
    _
  $region31: #{mlp_pallas.6} parent=0 // pred_check_branch
    %178 = sbr.rel (0) target = $region33
  $region32: #{mlp_pallas.6} parent=0 // pred_region
    _
  $region33: #{mlp_pallas.6} parent=0 // pred_fallthru
    _
  // Predicated region
  $region34: #{mlp_pallas.6} parent=0 // pred_check
    _
  $region35: #{mlp_pallas.6} parent=0 // pred_check_branch
    %180 = sbr.rel (0) target = $region37
  $region36: #{mlp_pallas.6} parent=0 // pred_region
    _
  $region37: #{mlp_pallas.6} parent=0 // pred_fallthru
    _
  // Predicated region
  $region38: #{mlp_pallas.6} parent=0 // pred_check
    _
  $region39: #{mlp_pallas.6} parent=0 // pred_check_branch
    %182 = sbr.rel (0) target = $region41
  $region40: #{mlp_pallas.6} parent=0 // pred_region
    _
  $region41: #{mlp_pallas.6} parent=0 // pred_fallthru
    _
  // Predicated region
  $region42: #{mlp_pallas.6} parent=0 // pred_check
    _
  $region43: #{mlp_pallas.6} parent=0 // pred_check_branch
    %184 = sbr.rel (0) target = $region45
  $region44: #{mlp_pallas.6} parent=0 // pred_region
    _
  $region45: #{mlp_pallas.6} parent=0 // pred_fallthru
    _

// kernel: mlp_pallas.5
$region0: #{mlp_pallas.5}
  #allocation0 [shape = 'u32[]', space=smem, size = 0x4, offset = 0x4, fixed_abs, tag = 'smem constant byte address 0x4 - core index']
  #allocation1 [shape = 'u32[144,128]{1,0:T(1,128)}', space=vmem, size = 0x12000, scoped, tag = 'internal scratch']
  %s0 = inlined_call_operand.vmem [shape: bf16[8,128], index: 0, kind: input, shape index: {}]
  %s1 = inlined_call_operand.vmem [shape: f32[1,128], index: 1, kind: input, shape index: {}]
  %s2 = inlined_call_operand.vmem [shape: f32[1,128], index: 2, kind: input, shape index: {}]
  %s3 = inlined_call_operand.hbm [shape: bf16[128,128], index: 3, kind: input, shape index: {}]
  %s4 = inlined_call_operand.vmem [shape: bf16[8,128], index: 4, kind: output, shape index: {0}]
  %s5 = inlined_call_operand.vmem [shape: f32[1,128], index: 5, kind: output, shape index: {1}]
  %s6 = inlined_call_operand.vmem [shape: f32[1,128], index: 6, kind: output, shape index: {2}]
  %7 = xla_tuple %s4, %s5, %s6
  %s8 = sld [smem:[#allocation0]]
  $region50: #{mlp_pallas.5} parent=0
    _
  %s10 = ssub.s32 1, %s8
  %s11 = scalar_select 0, %s10, %s8
  $region1: #{mlp_pallas.5} parent=0
    #allocation2 [shape = 'u8[32768]{0}', space=vmem, size = 0x8000, scoped, tag = 'input window, operand 3, single buffered']
    #allocation3 [shape = 's32[1]{0}', space=sflag, size = 0x4, scoped, tag = 'scoped memory for mlp_pallas.5']
    %12 = vsyncpa [#allocation3], 0
    // Predicated region
    $region2: #{mlp_pallas.5} parent=1 // pred_check
      _
    $region3: #{mlp_pallas.5} parent=1 // pred_check_branch
      %14 = sbr.rel (0) target = $region5
    $region4: #{mlp_pallas.5} parent=1 // pred_region
      _
    $region5: #{mlp_pallas.5} parent=1 // pred_fallthru
      _
    // Predicated region
    $region6: #{mlp_pallas.5} parent=1 // pred_check
      _
    $region7: #{mlp_pallas.5} parent=1 // pred_check_branch
      %16 = sbr.rel (0) target = $region9
    $region8: #{mlp_pallas.5} parent=1 // pred_region
      _
    $region9: #{mlp_pallas.5} parent=1 // pred_fallthru
      _
    // Predicated region
    $region10: #{mlp_pallas.5} parent=1 // pred_check
      _
    $region11: #{mlp_pallas.5} parent=1 // pred_check_branch
      %18 = sbr.rel (0) target = $region13
    $region12: #{mlp_pallas.5} parent=1 // pred_region
      _
    $region13: #{mlp_pallas.5} parent=1 // pred_fallthru
      _
    // Predicated region
    $region14: #{mlp_pallas.5} parent=1 // pred_check
      _
    $region15: #{mlp_pallas.5} parent=1 // pred_check_branch
      %20 = sbr.rel (0) target = $region17
    $region16: #{mlp_pallas.5} parent=1 // pred_region
      %s22 = ssub.s32 1024, 1024
      %23 = vsyncadd [#allocation3], %s22
      %s24 = sshll.u32 [#allocation2], 4
      %s25 = int_to_ptr.vmem [resolvable:$true] %s24
      %30 = dma.hbm_to_vmem [thread:$0]  %s3, 1024, %s25, [#allocation3], 64, 64, 4
    $region17: #{mlp_pallas.5} parent=1 // pred_fallthru
      _
    // Predicated region
    $region18: #{mlp_pallas.5} parent=1 // pred_check
      _
    $region19: #{mlp_pallas.5} parent=1 // pred_check_branch
      %32 = sbr.rel (0) target = $region21
    $region20: #{mlp_pallas.5} parent=1 // pred_region
      %33 = dma.done [#allocation3], 1024
    $region21: #{mlp_pallas.5} parent=1 // pred_fallthru
      _
    %v35 = vld [vmem:[%s0] sm:$0xf]
    %v36 = vunpack.c.l.bf16 %v35
    %v37 = vld [vmem:[%s1] sm:$0x1]
    %v39 = vlaneseq
    %v40 = vshrl.u32 %v39, 7
    %v41 = vsub.s32 0, %v40
    %v42 = vrot.slane %v37, %v41
    %v44 = vmul.f32 %v36, %v42
    %v45 = vld [vmem:[%s2] sm:$0x1]
    %v47 = vlaneseq
    %v48 = vshrl.u32 %v47, 7
    %v49 = vsub.s32 0, %v48
    %v50 = vrot.slane %v45, %v49
    %v52 = vadd.f32 %v44, %v50
    %v53 = vmax.f32 %v52, 0.0
    %v54 = vpack.c.bf16 %v53, %v53
    %v55 = vld [vmem:[#allocation2] sm:$0xf]
    %v56 = vld [vmem:[#allocation2 + $0x4] sm:$0xf]
    %v57 = vld [vmem:[#allocation2 + $0x8] sm:$0xf]
    %v58 = vld [vmem:[#allocation2 + $0xc] sm:$0xf]
    %v59 = vld [vmem:[#allocation2 + $0x10] sm:$0xf]
    %v60 = vld [vmem:[#allocation2 + $0x14] sm:$0xf]
    %v61 = vld [vmem:[#allocation2 + $0x18] sm:$0xf]
    %v62 = vld [vmem:[#allocation2 + $0x1c] sm:$0xf]
    %v63 = vld [vmem:[#allocation2 + $0x20] sm:$0xf]
    %v64 = vld [vmem:[#allocation2 + $0x24] sm:$0xf]
    %v65 = vld [vmem:[#allocation2 + $0x28] sm:$0xf]
    %v66 = vld [vmem:[#allocation2 + $0x2c] sm:$0xf]
    %v67 = vld [vmem:[#allocation2 + $0x30] sm:$0xf]
    %v68 = vld [vmem:[#allocation2 + $0x34] sm:$0xf]
    %v69 = vld [vmem:[#allocation2 + $0x38] sm:$0xf]
    %v70 = vld [vmem:[#allocation2 + $0x3c] sm:$0xf]
    %v87 = vunpack.c.l.b16 %v55
    %v88 = vunpack.c.l.b16 %v56
    %v89 = vunpack.c.l.b16 %v57
    %v90 = vunpack.c.l.b16 %v58
    %v91 = vunpack.c.l.b16 %v59
    %v92 = vunpack.c.l.b16 %v60
    %v93 = vunpack.c.l.b16 %v61
    %v94 = vunpack.c.l.b16 %v62
    %v95 = vunpack.c.l.b16 %v63
    %v96 = vunpack.c.l.b16 %v64
    %v97 = vunpack.c.l.b16 %v65
    %v98 = vunpack.c.l.b16 %v66
    %v99 = vunpack.c.l.b16 %v67
    %v100 = vunpack.c.l.b16 %v68
    %v101 = vunpack.c.l.b16 %v69
    %v102 = vunpack.c.l.b16 %v70
    %v103 = vpack.c.b16 %v88, %v87
    %v104 = vpack.c.b16 %v90, %v89
    %v105 = vpack.c.b16 %v92, %v91
    %v106 = vpack.c.b16 %v94, %v93
    %v107 = vpack.c.b16 %v96, %v95
    %v108 = vpack.c.b16 %v98, %v97
    %v109 = vpack.c.b16 %v100, %v99
    %v110 = vpack.c.b16 %v102, %v101
    %119 = vmatprep.subr.bf16.mxu0 0
    %120 = vmatpush1.bf16.msra.mxu0 %v110
    %121 = vmatprep.subr.bf16.mxu0 0
    %122 = vmatpush1.bf16.msra.mxu0 %v109
    %123 = vmatprep.subr.bf16.mxu0 0
    %124 = vmatpush1.bf16.msra.mxu0 %v108
    %125 = vmatprep.subr.bf16.mxu0 0
    %126 = vmatpush1.bf16.msra.mxu0 %v107
    %127 = vmatprep.subr.bf16.mxu0 0
    %128 = vmatpush1.bf16.msra.mxu0 %v106
    %129 = vmatprep.subr.bf16.mxu0 0
    %130 = vmatpush1.bf16.msra.mxu0 %v105
    %131 = vmatprep.subr.bf16.mxu0 0
    %132 = vmatpush1.bf16.msra.mxu0 %v104
    %133 = vmatprep.subr.bf16.mxu0 0
    %134 = vmatpush1.bf16.msra.mxu0 %v103
    %135 = vmatprep.subr.bf16.mxu0 0
    %136 = vmatpush2.bf16.msra.mxu0 0
    %137 = vmatprep.subr.bf16.mxu0 0
    %138 = vmatpush2.bf16.msra.mxu0 0
    %139 = vmatprep.subr.bf16.mxu0 0
    %140 = vmatpush2.bf16.msra.mxu0 0
    %141 = vmatprep.subr.bf16.mxu0 0
    %142 = vmatpush2.bf16.msra.mxu0 0
    %143 = vmatprep.subr.bf16.mxu0 0
    %144 = vmatpush2.bf16.msra.mxu0 0
    %145 = vmatprep.subr.bf16.mxu0 0
    %146 = vmatpush2.bf16.msra.mxu0 0
    %147 = vmatprep.subr.bf16.mxu0 0
    %148 = vmatpush2.bf16.msra.mxu0 0
    %149 = vmatprep.subr.bf16.mxu0 0
    %150 = vmatpush2.bf16.msra.mxu0 0
    %151 = vmatprep.mubr.bf16.mxu0 0
    %152 = vmatmul.mubr.bf16.gmra.mxu0 %v54
    %v153 = vpop.f32.mrf.mxu0
    %v154 = vadd.f32 0.0, %v153
    %v155 = vpop.f32.mrf.mxu0
    %v156 = vpop.f32.mrf.mxu0
    %v157 = vpop.f32.mrf.mxu0
    %158 = vdwg.mxu0
    %v159 = vpack.c.bf16 %v154, %v154
    %160 = vst [vmem:[%s4] sm:$0xf] %v159
    %v161 = vunpack.c.l.bf16 %v159
    %p162 = scmp.eq.s32.totalorder 0, 0
    // Predicated region
    $region22: #{mlp_pallas.5} parent=1 // pred_check
      %p163 = pneg %p162
    $region23: #{mlp_pallas.5} parent=1 // pred_check_branch
      %165 = sbr.rel (%p163) target = $region25
    $region24: #{mlp_pallas.5} parent=1 // pred_region
      %166 = vst [vmem:[%s5] sm:$0x1] 0.0
      %167 = vst [vmem:[%s6] sm:$0x1] 0.0
    $region25: #{mlp_pallas.5} parent=1 // pred_fallthru
      _
    %v168 = vld [vmem:[%s5] sm:$0x1]
    %v169 = vrot.slane %v161, 4
    %v170 = vadd.f32 %v161, %v169
    %v171 = vrot.slane %v170, 2
    %v172 = vadd.f32 %v170, %v171
    %v173 = vrot.slane %v172, 1
    %v174 = vadd.f32 %v172, %v173
    %v175 = vadd.f32 %v168, %v174
    %176 = vst [vmem:[%s5] sm:$0x1] %v175
    %v177 = vld [vmem:[%s6] sm:$0x1]
    %v178 = vmul.f32 %v161, %v161
    %v179 = vrot.slane %v178, 4
    %v180 = vadd.f32 %v178, %v179
    %v181 = vrot.slane %v180, 2
    %v182 = vadd.f32 %v180, %v181
    %v183 = vrot.slane %v182, 1
    %v184 = vadd.f32 %v182, %v183
    %v185 = vadd.f32 %v177, %v184
    %186 = vst [vmem:[%s6] sm:$0x1] %v185
    // Predicated region
    $region26: #{mlp_pallas.5} parent=1 // pred_check
      _
    $region27: #{mlp_pallas.5} parent=1 // pred_check_branch
      %188 = sbr.rel (0) target = $region29
    $region28: #{mlp_pallas.5} parent=1 // pred_region
      _
    $region29: #{mlp_pallas.5} parent=1 // pred_fallthru
      _
    // Predicated region
    $region30: #{mlp_pallas.5} parent=1 // pred_check
      _
    $region31: #{mlp_pallas.5} parent=1 // pred_check_branch
      %190 = sbr.rel (0) target = $region33
    $region32: #{mlp_pallas.5} parent=1 // pred_region
      _
    $region33: #{mlp_pallas.5} parent=1 // pred_fallthru
      _
    // Predicated region
    $region34: #{mlp_pallas.5} parent=1 // pred_check
      _
    $region35: #{mlp_pallas.5} parent=1 // pred_check_branch
      %192 = sbr.rel (0) target = $region37
    $region36: #{mlp_pallas.5} parent=1 // pred_region
      _
    $region37: #{mlp_pallas.5} parent=1 // pred_fallthru
      _
    // Predicated region
    $region38: #{mlp_pallas.5} parent=1 // pred_check
      _
    $region39: #{mlp_pallas.5} parent=1 // pred_check_branch
      %194 = sbr.rel (0) target = $region41
    $region40: #{mlp_pallas.5} parent=1 // pred_region
      _
    $region41: #{mlp_pallas.5} parent=1 // pred_fallthru
      _
    // Predicated region
    $region42: #{mlp_pallas.5} parent=1 // pred_check
      _
    $region43: #{mlp_pallas.5} parent=1 // pred_check_branch
      %196 = sbr.rel (0) target = $region45
    $region44: #{mlp_pallas.5} parent=1 // pred_region
      _
    $region45: #{mlp_pallas.5} parent=1 // pred_fallthru
      _
    // Predicated region
    $region46: #{mlp_pallas.5} parent=1 // pred_check
      _
    $region47: #{mlp_pallas.5} parent=1 // pred_check_branch
      %198 = sbr.rel (0) target = $region49
    $region48: #{mlp_pallas.5} parent=1 // pred_region
      _
    $region49: #{mlp_pallas.5} parent=1 // pred_fallthru
      _
    %199 = vsyncpa [#allocation3], 1

// kernel: mlp_pallas.7
$region0: #{mlp_pallas.7}
  #allocation0 [shape = 'u32[]', space=smem, size = 0x4, offset = 0x4, fixed_abs, tag = 'smem constant byte address 0x4 - core index']
  #allocation1 [shape = 'u32[144,128]{1,0:T(1,128)}', space=vmem, size = 0x12000, scoped, tag = 'internal scratch']
  %s0 = inlined_call_operand.vmem [shape: bf16[8,128], index: 0, kind: input, shape index: {}]
  %s1 = inlined_call_operand.vmem [shape: f32[1,128], index: 1, kind: input, shape index: {}]
  %s2 = inlined_call_operand.vmem [shape: f32[1,128], index: 2, kind: input, shape index: {}]
  %s3 = inlined_call_operand.vmem [shape: bf16[128,128], index: 3, kind: input, shape index: {}]
  %s4 = inlined_call_operand.vmem [shape: f32[1,128], index: 4, kind: input, shape index: {}]
  %s5 = inlined_call_operand.hbm [shape: f32[8,128], index: 5, kind: output, shape index: {}]
  %s6 = sld [smem:[#allocation0]]
  $region30: #{mlp_pallas.7} parent=0
    _
  %s8 = ssub.s32 1, %s6
  %s9 = scalar_select 0, %s8, %s6
  $region1: #{mlp_pallas.7} parent=0
    #allocation2 [shape = 'u8[4096]{0}', space=vmem, size = 0x1000, scoped, tag = 'output window, operand 0, single buffered']
    #allocation3 [shape = 's32[1]{0}', space=sflag, size = 0x4, scoped, tag = 'scoped memory for mlp_pallas.7']
    %10 = vsyncpa [#allocation3], 0
    // Predicated region
    $region2: #{mlp_pallas.7} parent=1 // pred_check
      _
    $region3: #{mlp_pallas.7} parent=1 // pred_check_branch
      %12 = sbr.rel (0) target = $region5
    $region4: #{mlp_pallas.7} parent=1 // pred_region
      _
    $region5: #{mlp_pallas.7} parent=1 // pred_fallthru
      _
    // Predicated region
    $region6: #{mlp_pallas.7} parent=1 // pred_check
      _
    $region7: #{mlp_pallas.7} parent=1 // pred_check_branch
      %14 = sbr.rel (0) target = $region9
    $region8: #{mlp_pallas.7} parent=1 // pred_region
      _
    $region9: #{mlp_pallas.7} parent=1 // pred_fallthru
      _
    // Predicated region
    $region10: #{mlp_pallas.7} parent=1 // pred_check
      _
    $region11: #{mlp_pallas.7} parent=1 // pred_check_branch
      %16 = sbr.rel (0) target = $region13
    $region12: #{mlp_pallas.7} parent=1 // pred_region
      _
    $region13: #{mlp_pallas.7} parent=1 // pred_fallthru
      _
    // Predicated region
    $region14: #{mlp_pallas.7} parent=1 // pred_check
      _
    $region15: #{mlp_pallas.7} parent=1 // pred_check_branch
      %18 = sbr.rel (0) target = $region17
    $region16: #{mlp_pallas.7} parent=1 // pred_region
      _
    $region17: #{mlp_pallas.7} parent=1 // pred_fallthru
      _
    // Predicated region
    $region18: #{mlp_pallas.7} parent=1 // pred_check
      _
    $region19: #{mlp_pallas.7} parent=1 // pred_check_branch
      %20 = sbr.rel (0) target = $region21
    $region20: #{mlp_pallas.7} parent=1 // pred_region
      _
    $region21: #{mlp_pallas.7} parent=1 // pred_fallthru
      _
    %v22 = vld [vmem:[%s0] sm:$0xf]
    %v23 = vunpack.c.l.bf16 %v22
    %v24 = vld [vmem:[%s1] sm:$0x1]
    %v26 = vlaneseq
    %v27 = vshrl.u32 %v26, 7
    %v28 = vsub.s32 0, %v27
    %v29 = vrot.slane %v24, %v28
    %v31 = vmul.f32 %v23, %v29
    %v32 = vld [vmem:[%s2] sm:$0x1]
    %v34 = vlaneseq
    %v35 = vshrl.u32 %v34, 7
    %v36 = vsub.s32 0, %v35
    %v37 = vrot.slane %v32, %v36
    %v39 = vadd.f32 %v31, %v37
    %v40 = vmax.f32 %v39, 0.0
    %v41 = vpack.c.bf16 %v40, %v40
    %v42 = vld [vmem:[%s3] sm:$0xf]
    %v43 = vld [vmem:[%s3 + $0x4] sm:$0xf]
    %v44 = vld [vmem:[%s3 + $0x8] sm:$0xf]
    %v45 = vld [vmem:[%s3 + $0xc] sm:$0xf]
    %v46 = vld [vmem:[%s3 + $0x10] sm:$0xf]
    %v47 = vld [vmem:[%s3 + $0x14] sm:$0xf]
    %v48 = vld [vmem:[%s3 + $0x18] sm:$0xf]
    %v49 = vld [vmem:[%s3 + $0x1c] sm:$0xf]
    %v50 = vld [vmem:[%s3 + $0x20] sm:$0xf]
    %v51 = vld [vmem:[%s3 + $0x24] sm:$0xf]
    %v52 = vld [vmem:[%s3 + $0x28] sm:$0xf]
    %v53 = vld [vmem:[%s3 + $0x2c] sm:$0xf]
    %v54 = vld [vmem:[%s3 + $0x30] sm:$0xf]
    %v55 = vld [vmem:[%s3 + $0x34] sm:$0xf]
    %v56 = vld [vmem:[%s3 + $0x38] sm:$0xf]
    %v57 = vld [vmem:[%s3 + $0x3c] sm:$0xf]
    %v58 = vld [vmem:[%s4] sm:$0x1]
    %v60 = vlaneseq
    %v61 = vshrl.u32 %v60, 7
    %v62 = vsub.s32 0, %v61
    %v63 = vrot.slane %v58, %v62
    %v81 = vunpack.c.l.b16 %v42
    %v82 = vunpack.c.l.b16 %v43
    %v83 = vunpack.c.l.b16 %v44
    %v84 = vunpack.c.l.b16 %v45
    %v85 = vunpack.c.l.b16 %v46
    %v86 = vunpack.c.l.b16 %v47
    %v87 = vunpack.c.l.b16 %v48
    %v88 = vunpack.c.l.b16 %v49
    %v89 = vunpack.c.l.b16 %v50
    %v90 = vunpack.c.l.b16 %v51
    %v91 = vunpack.c.l.b16 %v52
    %v92 = vunpack.c.l.b16 %v53
    %v93 = vunpack.c.l.b16 %v54
    %v94 = vunpack.c.l.b16 %v55
    %v95 = vunpack.c.l.b16 %v56
    %v96 = vunpack.c.l.b16 %v57
    %v97 = vpack.c.b16 %v82, %v81
    %v98 = vpack.c.b16 %v84, %v83
    %v99 = vpack.c.b16 %v86, %v85
    %v100 = vpack.c.b16 %v88, %v87
    %v101 = vpack.c.b16 %v90, %v89
    %v102 = vpack.c.b16 %v92, %v91
    %v103 = vpack.c.b16 %v94, %v93
    %v104 = vpack.c.b16 %v96, %v95
    %113 = vmatprep.subr.bf16.mxu0 0
    %114 = vmatpush1.bf16.msra.mxu0 %v104
    %115 = vmatprep.subr.bf16.mxu0 0
    %116 = vmatpush1.bf16.msra.mxu0 %v103
    %117 = vmatprep.subr.bf16.mxu0 0
    %118 = vmatpush1.bf16.msra.mxu0 %v102
    %119 = vmatprep.subr.bf16.mxu0 0
    %120 = vmatpush1.bf16.msra.mxu0 %v101
    %121 = vmatprep.subr.bf16.mxu0 0
    %122 = vmatpush1.bf16.msra.mxu0 %v100
    %123 = vmatprep.subr.bf16.mxu0 0
    %124 = vmatpush1.bf16.msra.mxu0 %v99
    %125 = vmatprep.subr.bf16.mxu0 0
    %126 = vmatpush1.bf16.msra.mxu0 %v98
    %127 = vmatprep.subr.bf16.mxu0 0
    %128 = vmatpush1.bf16.msra.mxu0 %v97
    %129 = vmatprep.subr.bf16.mxu0 0
    %130 = vmatpush2.bf16.msra.mxu0 0
    %131 = vmatprep.subr.bf16.mxu0 0
    %132 = vmatpush2.bf16.msra.mxu0 0
    %133 = vmatprep.subr.bf16.mxu0 0
    %134 = vmatpush2.bf16.msra.mxu0 0
    %135 = vmatprep.subr.bf16.mxu0 0
    %136 = vmatpush2.bf16.msra.mxu0 0
    %137 = vmatprep.subr.bf16.mxu0 0
    %138 = vmatpush2.bf16.msra.mxu0 0
    %139 = vmatprep.subr.bf16.mxu0 0
    %140 = vmatpush2.bf16.msra.mxu0 0
    %141 = vmatprep.subr.bf16.mxu0 0
    %142 = vmatpush2.bf16.msra.mxu0 0
    %143 = vmatprep.subr.bf16.mxu0 0
    %144 = vmatpush2.bf16.msra.mxu0 0
    %145 = vmatprep.mubr.bf16.mxu0 0
    %146 = vmatmul.mubr.bf16.gmra.mxu0 %v41
    %v147 = vpop.f32.mrf.mxu0
    %v148 = vadd.f32 %v63, %v147
    %v149 = vpop.f32.mrf.mxu0
    %v150 = vpop.f32.mrf.mxu0
    %v151 = vpop.f32.mrf.mxu0
    %152 = vdwg.mxu0
    %153 = vst [vmem:[#allocation2] sm:$0xff] %v148
    // Predicated region
    $region22: #{mlp_pallas.7} parent=1 // pred_check
      _
    $region23: #{mlp_pallas.7} parent=1 // pred_check_branch
      %155 = sbr.rel (0) target = $region25
    $region24: #{mlp_pallas.7} parent=1 // pred_region
      %s157 = ssub.s32 128, 128
      %158 = vsyncadd [#allocation3], %s157
      %s160 = sshll.u32 [#allocation2], 4
      %s161 = int_to_ptr.vmem [resolvable:$true] %s160
      %163 = dma.vmem_to_hbm [thread:$0]  %s161, 128, %s5, [#allocation3]
    $region25: #{mlp_pallas.7} parent=1 // pred_fallthru
      _
    // Predicated region
    $region26: #{mlp_pallas.7} parent=1 // pred_check
      _
    $region27: #{mlp_pallas.7} parent=1 // pred_check_branch
      %165 = sbr.rel (0) target = $region29
    $region28: #{mlp_pallas.7} parent=1 // pred_region
      %166 = dma.done [#allocation3], 128
    $region29: #{mlp_pallas.7} parent=1 // pred_fallthru
      _
    %167 = vsyncpa [#allocation3], 1

</llo_original>
